<compile_context>
chip_gen: v7x
topology: tpu7x:2x2x1
jax: 0.10.0
libtpu: 0.0.40
codegen_flags: <defaults>
</compile_context>

<pallas_src>
import functools

import jax
import jax.numpy as jnp
import numpy as np
from jax.experimental import pallas as pl
from jax.experimental.pallas import tpu as pltpu


# ----------------------------- configuration ------------------------------
INPUT_DIM = 16          # input_dim (feature width, conv kernel spans it fully)
SEQ_LEN = 16            # L (time / height dim of the NCHW input)
KERNEL_NUM = 8          # channels per conv
KERNEL_SIZES = (3, 4, 5)
HIDDEN_SIZE = 32
NUM_LAYERS = 5
BATCH = 2


# ------------------------------ Pallas kernel ------------------------------
def _make_kernel(K_max, D, T, n_fc, C_pad):
    """Build the kernel body with the static packed-slab row layout baked in.

    Packed slab layout (rows x 32 lanes, all f32):
      [0,            KD)              packed conv weights (zero-padded per K)
      [KD,           KD+T)            conv bias + additive time mask (-1e30 invalid)
      [KD+T,         KD+T+n_fc*C_pad) FC weight stack (layer-0 rows zero-padded)
      [KD+T+n_fc*C,  +8)              FC bias rows (padded to 8 rows)
    """
    KD = K_max * D
    r_bm = KD
    r_fw = KD + T
    r_fb = r_fw + n_fc * C_pad
    fcb_rows = ((n_fc + 7) // 8) * 8

    def kernel(x_ref, p_ref, out_ref):
        # x_ref: (N, T + K_max - 1, D) time-zero-padded input, p_ref: packed slab.
        x = x_ref[...]
        N = x.shape[0]

        # im2col: one (N*T, K_max*D) window matrix from K_max static shifted
        # slices.  (Concat relayout is off the critical path at this size;
        # roll-accumulated matmuls are the fallback if profiling disagrees.)
        windows = jnp.concatenate([x[:, k:k + T, :] for k in range(K_max)], axis=2)
        windows = windows.reshape(N * T, KD)

        # Every kernel size & channel in ONE MXU matmul against packed weights.
        cw = p_ref[0:KD, :]                                   # (KD, C_pad)
        score = jnp.dot(windows, cw, preferred_element_type=jnp.float32)
        score = score.reshape(N, T, C_pad)

        # Bias + additive time mask (valid: bias, invalid: -1e30), then ReLU
        # (clamps masked positions to 0, neutral for the max) and time max-pool.
        bias_mask = p_ref[r_bm:r_bm + T, :]                   # (T, C_pad)
        score = jnp.maximum(score + bias_mask[None], 0.0)
        h = jnp.max(score, axis=1)                            # (N, C_pad)

        # FC chain: n_fc x [Linear, ReLU] with uniform (C_pad, C_pad) packed
        # weights (dropout = identity at inference).  Static unroll.
        # TODO(synk): on v5e/v6e the 5-deep serial MXU chain is round-trip
        #             latency bound; overlap weight pushes only if profiling
        #             confirms MXU latency is critical.
        fcb = p_ref[r_fb:r_fb + fcb_rows, :]                  # (8, C_pad), aligned load
        for i in range(n_fc):
            w = p_ref[r_fw + i * C_pad:r_fw + (i + 1) * C_pad, :]
            h = jnp.maximum(
                jnp.dot(h, w, preferred_element_type=jnp.float32)
                + fcb[i:i + 1, :],
                0.0)
        out_ref[...] = h.astype(out_ref.dtype)

    return kernel


# --------------------------- parameter packing ------------------------------
def pack_params(conv_ws, conv_bs, fc_ws, fc_bs, kernel_sizes, seq_len):
    """Pack all params into ONE zero-padded (rows, hidden) f32 slab (host-side, once)."""
    n_k = len(kernel_sizes)
    K_max = max(kernel_sizes)
    D = conv_ws[0].shape[1]
    C = conv_ws[0].shape[2]
    nC = n_k * C
    hidden = fc_ws[0].shape[1]
    assert nC <= hidden, "packing assumes len(kernel_sizes)*kernel_num <= hidden_size"
    C_pad = hidden
    n_fc = len(fc_ws)
    T = seq_len
    KD = K_max * D
    fcb_rows = ((n_fc + 7) // 8) * 8

    slab = np.zeros((KD + T + n_fc * C_pad + fcb_rows, C_pad), np.float32)

    # Packed conv weights: each kernel size gets its K*D rows in its own column band.
    for ki, K in enumerate(kernel_sizes):
        w = np.asarray(conv_ws[ki])                           # (K, D, C)
        for k in range(K):
            slab[k * D:(k + 1) * D, ki * C:(ki + 1) * C] = w[k]

    # Conv bias folded with the additive time mask: -1e30 outside each kernel
    # size's valid window (and for the padded channels nC..C_pad).
    bm = np.full((T, C_pad), -1e30, np.float32)
    for ki, K in enumerate(kernel_sizes):
        Tk = seq_len - K + 1
        bm[:Tk, ki * C:(ki + 1) * C] = np.asarray(conv_bs[ki])
    slab[KD:KD + T, :] = bm

    # FC weight stack; layer 0's input rows nC..C_pad are zero (match padded channels).
    base = KD + T
    fw0 = np.zeros((C_pad, C_pad), np.float32)
    fw0[:nC, :] = np.asarray(fc_ws[0])
    slab[base:base + C_pad, :] = fw0
    for i in range(1, n_fc):
        slab[base + i * C_pad:base + (i + 1) * C_pad, :] = np.asarray(fc_ws[i])

    # FC bias rows (padded to 8 rows for an aligned load).
    fb_base = base + n_fc * C_pad
    for i in range(n_fc):
        slab[fb_base + i, :] = np.asarray(fc_bs[i]).reshape(-1)

    return jnp.asarray(slab)


# ------------------------------ forward builder ------------------------------
def build_cnn_feature_extractor(conv_ws, conv_bs, fc_ws, fc_bs,
                                kernel_sizes=KERNEL_SIZES, seq_len=SEQ_LEN):
    """Pack params once, return a jitted forward: (N,1,L,D) f32 -> (N, hidden) f32."""
    params = pack_params(conv_ws, conv_bs, fc_ws, fc_bs, kernel_sizes, seq_len)

    K_max = max(kernel_sizes)
    D = conv_ws[0].shape[1]
    C_pad = fc_ws[0].shape[1]
    n_fc = len(fc_ws)
    T = seq_len
    kernel = _make_kernel(K_max, D, T, n_fc, C_pad)
    vmem = pl.BlockSpec(memory_space=pltpu.MemorySpace.VMEM)

    @jax.jit
    def forward(x_nchw):
        assert x_nchw.shape[1] == 1 and x_nchw.shape[2] == seq_len
        x = x_nchw[:, 0, :, :]                                # (N, L, D)
        N = x.shape[0]
        # Pad the time axis so every im2col window at t = 0..L-1 exists;
        # positions running into the padding are masked via the bias term.
        x_pad = jnp.pad(x, ((0, 0), (0, K_max - 1), (0, 0)))

        flops = 2 * (N * T * K_max * D * C_pad + n_fc * N * C_pad * C_pad)
        bytes_acc = (x_pad.size + params.size + N * C_pad) * 4
        return pl.pallas_call(
            kernel,
            out_shape=jax.ShapeDtypeStruct((N, C_pad), jnp.float32),
            in_specs=[vmem, vmem],
            out_specs=vmem,
            cost_estimate=pl.CostEstimate(flops=flops, transcendentals=0,
                                          bytes_accessed=bytes_acc),
        )(x_pad, params)

    return forward


# --------------------------- parameter construction ------------------------
def init_params(key):
    """Deterministic PyTorch-style uniform(-1/sqrt(fan_in), 1/sqrt(fan_in)) init."""
    conv_ws, conv_bs, fc_ws, fc_bs = [], [], [], []
    for K in KERNEL_SIZES:
        key, kw, kb = jax.random.split(key, 3)
        bound = 1.0 / np.sqrt(K * INPUT_DIM)
        # stored as (K, D, C)  (PyTorch conv weight is (C, 1, K, D))
        conv_ws.append(jax.random.uniform(kw, (K, INPUT_DIM, KERNEL_NUM),
                                          jnp.float32, -bound, bound))
        conv_bs.append(jax.random.uniform(kb, (1, KERNEL_NUM),
                                          jnp.float32, -bound, bound))
    in_dim = len(KERNEL_SIZES) * KERNEL_NUM
    for i in range(NUM_LAYERS):
        key, kw, kb = jax.random.split(key, 3)
        fan_in = in_dim if i == 0 else HIDDEN_SIZE
        bound = 1.0 / np.sqrt(fan_in)
        fc_ws.append(jax.random.uniform(kw, (fan_in, HIDDEN_SIZE),
                                        jnp.float32, -bound, bound))
        fc_bs.append(jax.random.uniform(kb, (1, HIDDEN_SIZE),
                                        jnp.float32, -bound, bound))
    return conv_ws, conv_bs, fc_ws, fc_bs


# ------------------------------ pure-JAX reference -------------------------
def reference(x_nchw, conv_ws, conv_bs, fc_ws, fc_bs):
    x = x_nchw[:, 0]                    # (N, L, D)
    N, L, D = x.shape
    feats = []
    for ki, K in enumerate(KERNEL_SIZES):
        T = L - K + 1
        windows = jnp.stack([x[:, k:k + T, :] for k in range(K)], axis=2)  # (N,T,K,D)
        score = jnp.einsum('ntkd,kdc->ntc', windows, conv_ws[ki]) + conv_bs[ki]
        score = jnp.maximum(score, 0.0)
        feats.append(jnp.max(score, axis=1))                               # (N, C)
    h = jnp.concatenate(feats, axis=1)
    for w, b in zip(fc_ws, fc_bs):
        h = jnp.maximum(h @ w + b, 0.0)
    return h


# ----------------------------------- main -----------------------------------
if __name__ == "__main__":
    key = jax.random.PRNGKey(0)
    key, kx = jax.random.split(key)
    x = jax.random.normal(kx, (BATCH, 1, SEQ_LEN, INPUT_DIM), jnp.float32)

    conv_ws, conv_bs, fc_ws, fc_bs = init_params(key)

    forward = build_cnn_feature_extractor(conv_ws, conv_bs, fc_ws, fc_bs)
    out = jax.block_until_ready(forward(x))

    ref = jax.block_until_ready(reference(x, conv_ws, conv_bs, fc_ws, fc_bs))
    np.testing.assert_allclose(np.asarray(out), np.asarray(ref),
                               rtol=1e-5, atol=1e-5)
    assert out.shape == (BATCH, HIDDEN_SIZE)
    print("KERNEL_OK")
</pallas_src>

<mosaic_0001>
module attributes {stable_mosaic.version = 11 : i64} {
  func.func @kernel(%arg0: memref<2x20x16xf32, #tpu.memory_space<vmem>>, %arg1: memref<264x32xf32, #tpu.memory_space<vmem>>, %arg2: memref<2x32xf32, #tpu.memory_space<vmem>>) attributes {dimension_semantics = [], scalar_prefetch = 0 : i64, scratch_operands = 0 : i64, tpu.core_type = #tpu.core_type<tc>} {
    %c0 = arith.constant 0 : index
    %c0_0 = arith.constant 0 : index
    %c0_1 = arith.constant 0 : index
    %0 = vector.load %arg0[%c0, %c0_0, %c0_1] : memref<2x20x16xf32, #tpu.memory_space<vmem>>, vector<2x20x16xf32>
    %1 = vector.extract_strided_slice %0 {offsets = [0, 0, 0], sizes = [2, 16, 16], strides = [1, 1, 1]} : vector<2x20x16xf32> to vector<2x16x16xf32>
    %2 = vector.extract_strided_slice %0 {offsets = [0, 1, 0], sizes = [2, 16, 16], strides = [1, 1, 1]} : vector<2x20x16xf32> to vector<2x16x16xf32>
    %3 = vector.extract_strided_slice %0 {offsets = [0, 2, 0], sizes = [2, 16, 16], strides = [1, 1, 1]} : vector<2x20x16xf32> to vector<2x16x16xf32>
    %4 = vector.extract_strided_slice %0 {offsets = [0, 3, 0], sizes = [2, 16, 16], strides = [1, 1, 1]} : vector<2x20x16xf32> to vector<2x16x16xf32>
    %5 = vector.extract_strided_slice %0 {offsets = [0, 4, 0], sizes = [2, 16, 16], strides = [1, 1, 1]} : vector<2x20x16xf32> to vector<2x16x16xf32>
    %6 = tpu.concatenate %1, %2, %3, %4, %5 in 2 : vector<2x16x16xf32>, vector<2x16x16xf32>, vector<2x16x16xf32>, vector<2x16x16xf32>, vector<2x16x16xf32> -> vector<2x16x80xf32>
    %7 = vector.shape_cast %6 : vector<2x16x80xf32> to vector<32x80xf32>
    %c0_2 = arith.constant 0 : index
    %c0_3 = arith.constant 0 : index
    %8 = vector.load %arg1[%c0_2, %c0_3] : memref<264x32xf32, #tpu.memory_space<vmem>>, vector<80x32xf32>
    %cst = arith.constant dense<0.000000e+00> : vector<32x32xf32>
    %9 = tpu.matmul %7, %8, %cst {dimension_numbers = #tpu.dot_dimension_numbers<[1], [0], [0], [1], [0, 0, 1, 1], [], []>} : vector<32x80xf32>, vector<80x32xf32>, vector<32x32xf32> -> vector<32x32xf32>
    %10 = vector.shape_cast %9 : vector<32x32xf32> to vector<2x16x32xf32>
    %c80 = arith.constant 80 : index
    %c0_4 = arith.constant 0 : index
    %11 = vector.load %arg1[%c80, %c0_4] : memref<264x32xf32, #tpu.memory_space<vmem>>, vector<16x32xf32>
    %12 = vector.shape_cast %11 : vector<16x32xf32> to vector<1x16x32xf32>
    %13 = vector.broadcast %12 : vector<1x16x32xf32> to vector<2x16x32xf32>
    %14 = arith.addf %10, %13 : vector<2x16x32xf32>
    %cst_5 = arith.constant 0.000000e+00 : f32
    %15 = vector.broadcast %cst_5 : f32 to vector<2x16x32xf32>
    %16 = arith.maximumf %14, %15 : vector<2x16x32xf32>
    %cst_6 = arith.constant dense<0xFF800000> : vector<2x32xf32>
    %17 = vector.multi_reduction <maximumf>, %16, %cst_6 [1] : vector<2x16x32xf32> to vector<2x32xf32>
    %c256 = arith.constant 256 : index
    %c0_7 = arith.constant 0 : index
    %18 = vector.load %arg1[%c256, %c0_7] : memref<264x32xf32, #tpu.memory_space<vmem>>, vector<8x32xf32>
    %c96 = arith.constant 96 : index
    %c0_8 = arith.constant 0 : index
    %19 = vector.load %arg1[%c96, %c0_8] : memref<264x32xf32, #tpu.memory_space<vmem>>, vector<32x32xf32>
    %cst_9 = arith.constant dense<0.000000e+00> : vector<2x32xf32>
    %20 = tpu.matmul %17, %19, %cst_9 {dimension_numbers = #tpu.dot_dimension_numbers<[1], [0], [0], [1], [0, 0, 1, 1], [], []>} : vector<2x32xf32>, vector<32x32xf32>, vector<2x32xf32> -> vector<2x32xf32>
    %21 = vector.extract_strided_slice %18 {offsets = [0, 0], sizes = [1, 32], strides = [1, 1]} : vector<8x32xf32> to vector<1x32xf32>
    %22 = vector.broadcast %21 : vector<1x32xf32> to vector<2x32xf32>
    %23 = arith.addf %20, %22 : vector<2x32xf32>
    %cst_10 = arith.constant 0.000000e+00 : f32
    %24 = vector.broadcast %cst_10 : f32 to vector<2x32xf32>
    %25 = arith.maximumf %23, %24 : vector<2x32xf32>
    %c128 = arith.constant 128 : index
    %c0_11 = arith.constant 0 : index
    %26 = vector.load %arg1[%c128, %c0_11] : memref<264x32xf32, #tpu.memory_space<vmem>>, vector<32x32xf32>
    %cst_12 = arith.constant dense<0.000000e+00> : vector<2x32xf32>
    %27 = tpu.matmul %25, %26, %cst_12 {dimension_numbers = #tpu.dot_dimension_numbers<[1], [0], [0], [1], [0, 0, 1, 1], [], []>} : vector<2x32xf32>, vector<32x32xf32>, vector<2x32xf32> -> vector<2x32xf32>
    %28 = vector.extract_strided_slice %18 {offsets = [1, 0], sizes = [1, 32], strides = [1, 1]} : vector<8x32xf32> to vector<1x32xf32>
    %29 = vector.broadcast %28 : vector<1x32xf32> to vector<2x32xf32>
    %30 = arith.addf %27, %29 : vector<2x32xf32>
    %cst_13 = arith.constant 0.000000e+00 : f32
    %31 = vector.broadcast %cst_13 : f32 to vector<2x32xf32>
    %32 = arith.maximumf %30, %31 : vector<2x32xf32>
    %c160 = arith.constant 160 : index
    %c0_14 = arith.constant 0 : index
    %33 = vector.load %arg1[%c160, %c0_14] : memref<264x32xf32, #tpu.memory_space<vmem>>, vector<32x32xf32>
    %cst_15 = arith.constant dense<0.000000e+00> : vector<2x32xf32>
    %34 = tpu.matmul %32, %33, %cst_15 {dimension_numbers = #tpu.dot_dimension_numbers<[1], [0], [0], [1], [0, 0, 1, 1], [], []>} : vector<2x32xf32>, vector<32x32xf32>, vector<2x32xf32> -> vector<2x32xf32>
    %35 = vector.extract_strided_slice %18 {offsets = [2, 0], sizes = [1, 32], strides = [1, 1]} : vector<8x32xf32> to vector<1x32xf32>
    %36 = vector.broadcast %35 : vector<1x32xf32> to vector<2x32xf32>
    %37 = arith.addf %34, %36 : vector<2x32xf32>
    %cst_16 = arith.constant 0.000000e+00 : f32
    %38 = vector.broadcast %cst_16 : f32 to vector<2x32xf32>
    %39 = arith.maximumf %37, %38 : vector<2x32xf32>
    %c192 = arith.constant 192 : index
    %c0_17 = arith.constant 0 : index
    %40 = vector.load %arg1[%c192, %c0_17] : memref<264x32xf32, #tpu.memory_space<vmem>>, vector<32x32xf32>
    %cst_18 = arith.constant dense<0.000000e+00> : vector<2x32xf32>
    %41 = tpu.matmul %39, %40, %cst_18 {dimension_numbers = #tpu.dot_dimension_numbers<[1], [0], [0], [1], [0, 0, 1, 1], [], []>} : vector<2x32xf32>, vector<32x32xf32>, vector<2x32xf32> -> vector<2x32xf32>
    %42 = vector.extract_strided_slice %18 {offsets = [3, 0], sizes = [1, 32], strides = [1, 1]} : vector<8x32xf32> to vector<1x32xf32>
    %43 = vector.broadcast %42 : vector<1x32xf32> to vector<2x32xf32>
    %44 = arith.addf %41, %43 : vector<2x32xf32>
    %cst_19 = arith.constant 0.000000e+00 : f32
    %45 = vector.broadcast %cst_19 : f32 to vector<2x32xf32>
    %46 = arith.maximumf %44, %45 : vector<2x32xf32>
    %c224 = arith.constant 224 : index
    %c0_20 = arith.constant 0 : index
    %47 = vector.load %arg1[%c224, %c0_20] : memref<264x32xf32, #tpu.memory_space<vmem>>, vector<32x32xf32>
    %cst_21 = arith.constant dense<0.000000e+00> : vector<2x32xf32>
    %48 = tpu.matmul %46, %47, %cst_21 {dimension_numbers = #tpu.dot_dimension_numbers<[1], [0], [0], [1], [0, 0, 1, 1], [], []>} : vector<2x32xf32>, vector<32x32xf32>, vector<2x32xf32> -> vector<2x32xf32>
    %49 = vector.extract_strided_slice %18 {offsets = [4, 0], sizes = [1, 32], strides = [1, 1]} : vector<8x32xf32> to vector<1x32xf32>
    %50 = vector.broadcast %49 : vector<1x32xf32> to vector<2x32xf32>
    %51 = arith.addf %48, %50 : vector<2x32xf32>
    %cst_22 = arith.constant 0.000000e+00 : f32
    %52 = vector.broadcast %cst_22 : f32 to vector<2x32xf32>
    %53 = arith.maximumf %51, %52 : vector<2x32xf32>
    %c0_23 = arith.constant 0 : index
    %c0_24 = arith.constant 0 : index
    %54 = vector.load %arg2[%c0_23, %c0_24] : memref<2x32xf32, #tpu.memory_space<vmem>>, vector<2x32xf32>
    tpu.vector_store %arg2[%c0_23, %c0_24], %53 {strides = array<i32>} : memref<2x32xf32, #tpu.memory_space<vmem>>, vector<2x32xf32>,
    return
  }
}

</mosaic_0001>

<llo_original>
// kernel: forward.1
$region0: #{forward.1}
  #allocation0 [shape = 'u32[]', space=smem, size = 0x4, offset = 0x4, fixed_abs, tag = 'smem constant byte address 0x4 - core index']
  #allocation1 [shape = 'u32[144,128]{1,0:T(1,128)}', space=vmem, size = 0x12000, scoped, tag = 'internal scratch']
  %s0 = inlined_call_operand.vmem [shape: f32[2,20,16], index: 0, kind: input, shape index: {}]
  %s1 = inlined_call_operand.hbm [shape: f32[264,32], index: 1, kind: input, shape index: {}]
  %s2 = inlined_call_operand.hbm [shape: f32[2,32], index: 2, kind: output, shape index: {}]
  %s3 = sld [smem:[#allocation0]]
  $region22: #{forward.1} parent=0
    _
  %s5 = ssub.s32 1, %s3
  %s6 = scalar_select 0, %s5, %s3
  $region1: #{forward.1} parent=0
    #allocation2 [shape = 'u8[135168]{0}', space=vmem, size = 0x21000, scoped, tag = 'input window, operand 1, single buffered']
    #allocation3 [shape = 's32[1]{0}', space=sflag, size = 0x4, scoped, tag = 'scoped memory for forward.1']
    #allocation4 [shape = 's32[1]{0}', space=sflag, size = 0x4, scoped, tag = 'scoped memory for forward.1']
    #allocation5 [shape = 'u8[1024]{0}', space=vmem, size = 0x400, scoped, tag = 'output window, operand 0, single buffered']
    %7 = vsyncpa [#allocation3], 0
    %8 = vsyncpa [#allocation4], 0
    // Predicated region
    $region2: #{forward.1} parent=1 // pred_check
      _
    $region3: #{forward.1} parent=1 // pred_check_branch
      %10 = sbr.rel (0) target = $region5
    $region4: #{forward.1} parent=1 // pred_region
      _
    $region5: #{forward.1} parent=1 // pred_fallthru
      _
    // Predicated region
    $region6: #{forward.1} parent=1 // pred_check
      _
    $region7: #{forward.1} parent=1 // pred_check_branch
      %12 = sbr.rel (0) target = $region9
    $region8: #{forward.1} parent=1 // pred_region
      %s14 = ssub.s32 4224, 4224
      %15 = vsyncadd [#allocation3], %s14
      %s16 = sshll.u32 [#allocation2], 4
      %s17 = int_to_ptr.vmem [resolvable:$true] %s16
      %22 = dma.hbm_to_vmem [thread:$0]  %s1, 4224, %s17, [#allocation3], 128, 128, 8
    $region9: #{forward.1} parent=1 // pred_fallthru
      _
    // Predicated region
    $region10: #{forward.1} parent=1 // pred_check
      _
    $region11: #{forward.1} parent=1 // pred_check_branch
      %24 = sbr.rel (0) target = $region13
    $region12: #{forward.1} parent=1 // pred_region
      %25 = dma.done [#allocation3], 4224
    $region13: #{forward.1} parent=1 // pred_fallthru
      _
    %v26 = vld [vmem:[%s0] sm:$0xff]
    %v27 = vld [vmem:[%s0 + $0x8] sm:$0xff]
    %v28 = vld [vmem:[%s0 + $0x10] sm:$0xf]
    %v29 = vld [vmem:[%s0 + $0x18] sm:$0xff]
    %v30 = vld [vmem:[%s0 + $0x20] sm:$0xff]
    %v31 = vld [vmem:[%s0 + $0x28] sm:$0xf]
    %vm38 = vcmask 1046528
    %v39 = vrot.slane %v26, 1
    %v40 = vrot.slane %v27, 1
    %v41 = vsel %vm38, %v39, %v40
    %v42 = vrot.slane %v28, 1
    %v43 = vsel %vm38, %v40, %v42
    %v44 = vrot.slane %v29, 1
    %v45 = vrot.slane %v30, 1
    %v46 = vsel %vm38, %v44, %v45
    %v47 = vrot.slane %v31, 1
    %v48 = vsel %vm38, %v45, %v47
    %49 = vrot.lane.b32.xlu0 %v41, 16
    %v50 = vpop.permute.xlu0 %49
    %51 = vrot.lane.b32.xlu0 %v43, 16
    %v52 = vpop.permute.xlu0 %51
    %53 = vrot.lane.b32.xlu0 %v46, 16
    %v54 = vpop.permute.xlu0 %53
    %55 = vrot.lane.b32.xlu0 %v48, 16
    %v56 = vpop.permute.xlu0 %55
    %vm61 = vcmask 1045504
    %v62 = vrot.slane %v26, 2
    %v63 = vrot.slane %v27, 2
    %v64 = vsel %vm61, %v62, %v63
    %v65 = vrot.slane %v28, 2
    %v66 = vsel %vm61, %v63, %v65
    %v67 = vrot.slane %v29, 2
    %v68 = vrot.slane %v30, 2
    %v69 = vsel %vm61, %v67, %v68
    %v70 = vrot.slane %v31, 2
    %v71 = vsel %vm61, %v68, %v70
    %72 = vrot.lane.b32.xlu0 %v64, 32
    %v73 = vpop.permute.xlu0 %72
    %74 = vrot.lane.b32.xlu0 %v66, 32
    %v75 = vpop.permute.xlu0 %74
    %76 = vrot.lane.b32.xlu0 %v69, 32
    %v77 = vpop.permute.xlu0 %76
    %78 = vrot.lane.b32.xlu0 %v71, 32
    %v79 = vpop.permute.xlu0 %78
    %vm84 = vcmask 1044480
    %v85 = vrot.slane %v26, 3
    %v86 = vrot.slane %v27, 3
    %v87 = vsel %vm84, %v85, %v86
    %v88 = vrot.slane %v28, 3
    %v89 = vsel %vm84, %v86, %v88
    %v90 = vrot.slane %v29, 3
    %v91 = vrot.slane %v30, 3
    %v92 = vsel %vm84, %v90, %v91
    %v93 = vrot.slane %v31, 3
    %v94 = vsel %vm84, %v91, %v93
    %95 = vrot.lane.b32.xlu0 %v87, 48
    %v96 = vpop.permute.xlu0 %95
    %97 = vrot.lane.b32.xlu0 %v89, 48
    %v98 = vpop.permute.xlu0 %97
    %99 = vrot.lane.b32.xlu0 %v92, 48
    %v100 = vpop.permute.xlu0 %99
    %101 = vrot.lane.b32.xlu0 %v94, 48
    %v102 = vpop.permute.xlu0 %101
    %vm107 = vcmask 1043456
    %v108 = vrot.slane %v26, 4
    %v109 = vrot.slane %v27, 4
    %v110 = vsel %vm107, %v108, %v109
    %v111 = vrot.slane %v28, 4
    %v112 = vsel %vm107, %v109, %v111
    %v113 = vrot.slane %v29, 4
    %v114 = vrot.slane %v30, 4
    %v115 = vsel %vm107, %v113, %v114
    %v116 = vrot.slane %v31, 4
    %v117 = vsel %vm107, %v114, %v116
    %118 = vrot.lane.b32.xlu0 %v110, 64
    %v119 = vpop.permute.xlu0 %118
    %120 = vrot.lane.b32.xlu0 %v112, 64
    %v121 = vpop.permute.xlu0 %120
    %122 = vrot.lane.b32.xlu0 %v115, 64
    %v123 = vpop.permute.xlu0 %122
    %124 = vrot.lane.b32.xlu0 %v117, 64
    %v125 = vpop.permute.xlu0 %124
    %vm130 = vcmask 130048
    %v131 = vsel %vm130, %v26, %v50
    %v132 = vsel %vm130, %v27, %v52
    %v133 = vsel %vm130, %v29, %v54
    %v134 = vsel %vm130, %v30, %v56
    %vm135 = vcmask 261120
    %v136 = vsel %vm135, %v131, %v73
    %v137 = vsel %vm135, %v132, %v75
    %v138 = vsel %vm135, %v133, %v77
    %v139 = vsel %vm135, %v134, %v79
    %vm140 = vcmask 392192
    %v141 = vsel %vm140, %v136, %v96
    %v142 = vsel %vm140, %v137, %v98
    %v143 = vsel %vm140, %v138, %v100
    %v144 = vsel %vm140, %v139, %v102
    %vm145 = vcmask 523264
    %v146 = vsel %vm145, %v141, %v119
    %v147 = vsel %vm145, %v142, %v121
    %v148 = vsel %vm145, %v143, %v123
    %v149 = vsel %vm145, %v144, %v125
    %v150 = vld [vmem:[#allocation2] sm:$0xff]
    %v151 = vld [vmem:[#allocation2 + $0x8] sm:$0xff]
    %v152 = vld [vmem:[#allocation2 + $0x10] sm:$0xff]
    %v153 = vld [vmem:[#allocation2 + $0x18] sm:$0xff]
    %v154 = vld [vmem:[#allocation2 + $0x20] sm:$0xff]
    %v155 = vld [vmem:[#allocation2 + $0x28] sm:$0xff]
    %v156 = vld [vmem:[#allocation2 + $0x30] sm:$0xff]
    %v157 = vld [vmem:[#allocation2 + $0x38] sm:$0xff]
    %v158 = vld [vmem:[#allocation2 + $0x40] sm:$0xff]
    %v159 = vld [vmem:[#allocation2 + $0x48] sm:$0xff]
    %vm160 = vcmask 654336
    %v162 = vsel %vm160, %v146, 0
    %v165 = vsel %vm160, %v147, 0
    %v168 = vsel %vm160, %v148, 0
    %v171 = vsel %vm160, %v149, 0
    %173 = vmatprep.subr.mxu0 0.0
    %174 = vmatpush1.msra.mxu0 %v150
    %175 = vmatprep.subr.mxu0 0.0
    %176 = vmatpush1.msra.mxu0 %v151
    %177 = vmatprep.subr.mxu0 0.0
    %178 = vmatpush1.msra.mxu0 %v152
    %179 = vmatprep.subr.mxu0 0.0
    %180 = vmatpush1.msra.mxu0 %v153
    %181 = vmatprep.subr.mxu0 0.0
    %182 = vmatpush1.msra.mxu0 %v154
    %183 = vmatprep.subr.mxu0 0.0
    %184 = vmatpush1.msra.mxu0 %v155
    %185 = vmatprep.subr.mxu0 0.0
    %186 = vmatpush1.msra.mxu0 %v156
    %187 = vmatprep.subr.mxu0 0.0
    %188 = vmatpush1.msra.mxu0 %v157
    %189 = vmatprep.subr.mxu0 0.0
    %190 = vmatpush1.msra.mxu0 %v158
    %191 = vmatprep.subr.mxu0 0.0
    %192 = vmatpush1.msra.mxu0 %v159
    %193 = vmatprep.subr.mxu0 0.0
    %194 = vmatpush1.msra.mxu0 0.0
    %195 = vmatprep.subr.mxu0 0.0
    %196 = vmatpush1.msra.mxu0 0.0
    %197 = vmatprep.subr.mxu0 0.0
    %198 = vmatpush1.msra.mxu0 0.0
    %199 = vmatprep.subr.mxu0 0.0
    %200 = vmatpush1.msra.mxu0 0.0
    %201 = vmatprep.subr.mxu0 0.0
    %202 = vmatpush1.msra.mxu0 0.0
    %203 = vmatprep.subr.mxu0 0.0
    %204 = vmatpush1.msra.mxu0 0.0
    %205 = vmatprep.subr.mxu0 0.0
    %206 = vmatpush1.msra.mxu0 0.0
    %207 = vmatprep.subr.mxu0 0.0
    %208 = vmatpush1.msra.mxu0 0.0
    %209 = vmatprep.subr.mxu0 0.0
    %210 = vmatpush1.msra.mxu0 0.0
    %211 = vmatprep.subr.mxu0 0.0
    %212 = vmatpush1.msra.mxu0 0.0
    %213 = vmatprep.subr.mxu0 0.0
    %214 = vmatpush1.msra.mxu0 0.0
    %215 = vmatprep.subr.mxu0 0.0
    %216 = vmatpush1.msra.mxu0 0.0
    %217 = vmatprep.subr.mxu0 0.0
    %218 = vmatpush1.msra.mxu0 0.0
    %219 = vmatprep.subr.mxu0 0.0
    %220 = vmatpush1.msra.mxu0 0.0
    %221 = vmatprep.subr.mxu0 0.0
    %222 = vmatpush1.msra.mxu0 0.0
    %223 = vmatprep.subr.mxu0 0.0
    %224 = vmatpush1.msra.mxu0 0.0
    %225 = vmatprep.subr.mxu0 0.0
    %226 = vmatpush1.msra.mxu0 0.0
    %227 = vmatprep.subr.mxu0 0.0
    %228 = vmatpush1.msra.mxu0 0.0
    %229 = vmatprep.subr.mxu0 0.0
    %230 = vmatpush1.msra.mxu0 0.0
    %231 = vmatprep.subr.mxu0 0.0
    %232 = vmatpush1.msra.mxu0 0.0
    %233 = vmatprep.subr.mxu0 0.0
    %234 = vmatpush1.msra.mxu0 0.0
    %235 = vmatprep.subr.mxu0 0.0
    %236 = vmatpush1.msra.mxu0 0.0
    %237 = vmatprep.mubr.f32.mxu0 0.0
    %238 = vmatmul.mubr.f32.gmra.mrb[0].mxu0 %v162
    %v239 = vpop.f32.mrb[0].mxu0
    %v240 = vadd.f32 0.0, %v239
    %v241 = vpop.f32.mrb[0].mxu0
    %242 = vmatprep.mubr.f32.mxu0 0.0
    %243 = vmatmul.mubr.f32.gmra.mrb[0].mxu0 %v165
    %v244 = vpop.f32.mrb[0].mxu0
    %v245 = vadd.f32 0.0, %v244
    %v246 = vpop.f32.mrb[0].mxu0
    %247 = vmatprep.mubr.f32.mxu0 0.0
    %248 = vmatmul.mubr.f32.gmra.mrb[0].mxu0 %v168
    %v249 = vpop.f32.mrb[0].mxu0
    %v250 = vadd.f32 0.0, %v249
    %v251 = vpop.f32.mrb[0].mxu0
    %252 = vmatprep.mubr.f32.mxu0 0.0
    %253 = vmatmul.mubr.f32.gmra.mrb[0].mxu0 %v171
    %v254 = vpop.f32.mrb[0].mxu0
    %v255 = vadd.f32 0.0, %v254
    %v256 = vpop.f32.mrb[0].mxu0
    %257 = vdwg.mxu0
    %v258 = vld [vmem:[#allocation2 + $0x50] sm:$0xff]
    %v259 = vld [vmem:[#allocation2 + $0x58] sm:$0xff]
    %v260 = vadd.f32 %v240, %v258
    %v261 = vadd.f32 %v245, %v259
    %v262 = vadd.f32 %v250, %v258
    %v263 = vadd.f32 %v255, %v259
    %v264 = vmax.f32 %v260, 0.0
    %v265 = vmax.f32 %v261, 0.0
    %v266 = vmax.f32 %v262, 0.0
    %v267 = vmax.f32 %v263, 0.0
    %v268 = vsel %vm135, %v264, -inf
    %v269 = vsel %vm135, %v265, -inf
    %v270 = vmax.f32 %v268, %v269
    %v271 = vrot.slane %v270, 4
    %v272 = vmax.f32 %v270, %v271
    %v273 = vrot.slane %v272, 2
    %v274 = vmax.f32 %v272, %v273
    %v275 = vrot.slane %v274, 1
    %v276 = vmax.f32 %v274, %v275
    %v277 = vsel %vm135, %v266, -inf
    %v278 = vsel %vm135, %v267, -inf
    %v279 = vmax.f32 %v277, %v278
    %v280 = vrot.slane %v279, 4
    %v281 = vmax.f32 %v279, %v280
    %v282 = vrot.slane %v281, 2
    %v283 = vmax.f32 %v281, %v282
    %v284 = vrot.slane %v283, 1
    %v285 = vmax.f32 %v283, %v284
    %v286 = vld [vmem:[#allocation2 + $0x100] sm:$0xff]
    %v287 = vld [vmem:[#allocation2 + $0x60] sm:$0xff]
    %v288 = vld [vmem:[#allocation2 + $0x68] sm:$0xff]
    %v289 = vld [vmem:[#allocation2 + $0x70] sm:$0xff]
    %v290 = vld [vmem:[#allocation2 + $0x78] sm:$0xff]
    %v291 = vlaneseq
    %v292 = vshrl.u32 %v291, 7
    %v293 = vsub.s32 0, %v292
    %v294 = vrot.slane %v286, %v293
    %vm297 = vcmask 1041409
    %v298 = vsel %vm297, %v285, %v276
    %v299 = vsel %vm135, %v298, 0
    %301 = vmatprep.subr.mxu0 0.0
    %302 = vmatpush1.msra.mxu0 %v287
    %303 = vmatprep.subr.mxu0 0.0
    %304 = vmatpush1.msra.mxu0 %v288
    %305 = vmatprep.subr.mxu0 0.0
    %306 = vmatpush1.msra.mxu0 %v289
    %307 = vmatprep.subr.mxu0 0.0
    %308 = vmatpush1.msra.mxu0 %v290
    %309 = vmatprep.subr.mxu0 0.0
    %310 = vmatpush1.msra.mxu0 0.0
    %311 = vmatprep.subr.mxu0 0.0
    %312 = vmatpush1.msra.mxu0 0.0
    %313 = vmatprep.subr.mxu0 0.0
    %314 = vmatpush1.msra.mxu0 0.0
    %315 = vmatprep.subr.mxu0 0.0
    %316 = vmatpush1.msra.mxu0 0.0
    %317 = vmatprep.subr.mxu0 0.0
    %318 = vmatpush1.msra.mxu0 0.0
    %319 = vmatprep.subr.mxu0 0.0
    %320 = vmatpush1.msra.mxu0 0.0
    %321 = vmatprep.subr.mxu0 0.0
    %322 = vmatpush1.msra.mxu0 0.0
    %323 = vmatprep.subr.mxu0 0.0
    %324 = vmatpush1.msra.mxu0 0.0
    %325 = vmatprep.subr.mxu0 0.0
    %326 = vmatpush1.msra.mxu0 0.0
    %327 = vmatprep.subr.mxu0 0.0
    %328 = vmatpush1.msra.mxu0 0.0
    %329 = vmatprep.subr.mxu0 0.0
    %330 = vmatpush1.msra.mxu0 0.0
    %331 = vmatprep.subr.mxu0 0.0
    %332 = vmatpush1.msra.mxu0 0.0
    %333 = vmatprep.subr.mxu0 0.0
    %334 = vmatpush1.msra.mxu0 0.0
    %335 = vmatprep.subr.mxu0 0.0
    %336 = vmatpush1.msra.mxu0 0.0
    %337 = vmatprep.subr.mxu0 0.0
    %338 = vmatpush1.msra.mxu0 0.0
    %339 = vmatprep.subr.mxu0 0.0
    %340 = vmatpush1.msra.mxu0 0.0
    %341 = vmatprep.subr.mxu0 0.0
    %342 = vmatpush1.msra.mxu0 0.0
    %343 = vmatprep.subr.mxu0 0.0
    %344 = vmatpush1.msra.mxu0 0.0
    %345 = vmatprep.subr.mxu0 0.0
    %346 = vmatpush1.msra.mxu0 0.0
    %347 = vmatprep.subr.mxu0 0.0
    %348 = vmatpush1.msra.mxu0 0.0
    %349 = vmatprep.subr.mxu0 0.0
    %350 = vmatpush1.msra.mxu0 0.0
    %351 = vmatprep.subr.mxu0 0.0
    %352 = vmatpush1.msra.mxu0 0.0
    %353 = vmatprep.subr.mxu0 0.0
    %354 = vmatpush1.msra.mxu0 0.0
    %355 = vmatprep.subr.mxu0 0.0
    %356 = vmatpush1.msra.mxu0 0.0
    %357 = vmatprep.subr.mxu0 0.0
    %358 = vmatpush1.msra.mxu0 0.0
    %359 = vmatprep.subr.mxu0 0.0
    %360 = vmatpush1.msra.mxu0 0.0
    %361 = vmatprep.subr.mxu0 0.0
    %362 = vmatpush1.msra.mxu0 0.0
    %363 = vmatprep.subr.mxu0 0.0
    %364 = vmatpush1.msra.mxu0 0.0
    %365 = vmatprep.mubr.f32.mxu0 0.0
    %366 = vmatmul.mubr.f32.gmra.mrb[0].mxu0 %v299
    %v367 = vpop.f32.mrb[0].mxu0
    %v368 = vadd.f32 %v294, %v367
    %v369 = vpop.f32.mrb[0].mxu0
    %370 = vdwg.mxu0
    %v371 = vmax.f32 %v368, 0.0
    %v372 = vld [vmem:[#allocation2 + $0x80] sm:$0xff]
    %v373 = vld [vmem:[#allocation2 + $0x88] sm:$0xff]
    %v374 = vld [vmem:[#allocation2 + $0x90] sm:$0xff]
    %v375 = vld [vmem:[#allocation2 + $0x98] sm:$0xff]
    %v376 = vlaneseq
    %v377 = vshrl.u32 %v376, 7
    %v378 = vsub.s32 1, %v377
    %v379 = vrot.slane %v286, %v378
    %v381 = vsel %vm135, %v371, 0
    %383 = vmatprep.subr.mxu0 0.0
    %384 = vmatpush1.msra.mxu0 %v372
    %385 = vmatprep.subr.mxu0 0.0
    %386 = vmatpush1.msra.mxu0 %v373
    %387 = vmatprep.subr.mxu0 0.0
    %388 = vmatpush1.msra.mxu0 %v374
    %389 = vmatprep.subr.mxu0 0.0
    %390 = vmatpush1.msra.mxu0 %v375
    %391 = vmatprep.subr.mxu0 0.0
    %392 = vmatpush1.msra.mxu0 0.0
    %393 = vmatprep.subr.mxu0 0.0
    %394 = vmatpush1.msra.mxu0 0.0
    %395 = vmatprep.subr.mxu0 0.0
    %396 = vmatpush1.msra.mxu0 0.0
    %397 = vmatprep.subr.mxu0 0.0
    %398 = vmatpush1.msra.mxu0 0.0
    %399 = vmatprep.subr.mxu0 0.0
    %400 = vmatpush1.msra.mxu0 0.0
    %401 = vmatprep.subr.mxu0 0.0
    %402 = vmatpush1.msra.mxu0 0.0
    %403 = vmatprep.subr.mxu0 0.0
    %404 = vmatpush1.msra.mxu0 0.0
    %405 = vmatprep.subr.mxu0 0.0
    %406 = vmatpush1.msra.mxu0 0.0
    %407 = vmatprep.subr.mxu0 0.0
    %408 = vmatpush1.msra.mxu0 0.0
    %409 = vmatprep.subr.mxu0 0.0
    %410 = vmatpush1.msra.mxu0 0.0
    %411 = vmatprep.subr.mxu0 0.0
    %412 = vmatpush1.msra.mxu0 0.0
    %413 = vmatprep.subr.mxu0 0.0
    %414 = vmatpush1.msra.mxu0 0.0
    %415 = vmatprep.subr.mxu0 0.0
    %416 = vmatpush1.msra.mxu0 0.0
    %417 = vmatprep.subr.mxu0 0.0
    %418 = vmatpush1.msra.mxu0 0.0
    %419 = vmatprep.subr.mxu0 0.0
    %420 = vmatpush1.msra.mxu0 0.0
    %421 = vmatprep.subr.mxu0 0.0
    %422 = vmatpush1.msra.mxu0 0.0
    %423 = vmatprep.subr.mxu0 0.0
    %424 = vmatpush1.msra.mxu0 0.0
    %425 = vmatprep.subr.mxu0 0.0
    %426 = vmatpush1.msra.mxu0 0.0
    %427 = vmatprep.subr.mxu0 0.0
    %428 = vmatpush1.msra.mxu0 0.0
    %429 = vmatprep.subr.mxu0 0.0
    %430 = vmatpush1.msra.mxu0 0.0
    %431 = vmatprep.subr.mxu0 0.0
    %432 = vmatpush1.msra.mxu0 0.0
    %433 = vmatprep.subr.mxu0 0.0
    %434 = vmatpush1.msra.mxu0 0.0
    %435 = vmatprep.subr.mxu0 0.0
    %436 = vmatpush1.msra.mxu0 0.0
    %437 = vmatprep.subr.mxu0 0.0
    %438 = vmatpush1.msra.mxu0 0.0
    %439 = vmatprep.subr.mxu0 0.0
    %440 = vmatpush1.msra.mxu0 0.0
    %441 = vmatprep.subr.mxu0 0.0
    %442 = vmatpush1.msra.mxu0 0.0
    %443 = vmatprep.subr.mxu0 0.0
    %444 = vmatpush1.msra.mxu0 0.0
    %445 = vmatprep.subr.mxu0 0.0
    %446 = vmatpush1.msra.mxu0 0.0
    %447 = vmatprep.mubr.f32.mxu0 0.0
    %448 = vmatmul.mubr.f32.gmra.mrb[0].mxu0 %v381
    %v449 = vpop.f32.mrb[0].mxu0
    %v450 = vadd.f32 %v379, %v449
    %v451 = vpop.f32.mrb[0].mxu0
    %452 = vdwg.mxu0
    %v453 = vmax.f32 %v450, 0.0
    %v454 = vld [vmem:[#allocation2 + $0xa0] sm:$0xff]
    %v455 = vld [vmem:[#allocation2 + $0xa8] sm:$0xff]
    %v456 = vld [vmem:[#allocation2 + $0xb0] sm:$0xff]
    %v457 = vld [vmem:[#allocation2 + $0xb8] sm:$0xff]
    %v458 = vlaneseq
    %v459 = vshrl.u32 %v458, 7
    %v460 = vsub.s32 2, %v459
    %v461 = vrot.slane %v286, %v460
    %v463 = vsel %vm135, %v453, 0
    %465 = vmatprep.subr.mxu0 0.0
    %466 = vmatpush1.msra.mxu0 %v454
    %467 = vmatprep.subr.mxu0 0.0
    %468 = vmatpush1.msra.mxu0 %v455
    %469 = vmatprep.subr.mxu0 0.0
    %470 = vmatpush1.msra.mxu0 %v456
    %471 = vmatprep.subr.mxu0 0.0
    %472 = vmatpush1.msra.mxu0 %v457
    %473 = vmatprep.subr.mxu0 0.0
    %474 = vmatpush1.msra.mxu0 0.0
    %475 = vmatprep.subr.mxu0 0.0
    %476 = vmatpush1.msra.mxu0 0.0
    %477 = vmatprep.subr.mxu0 0.0
    %478 = vmatpush1.msra.mxu0 0.0
    %479 = vmatprep.subr.mxu0 0.0
    %480 = vmatpush1.msra.mxu0 0.0
    %481 = vmatprep.subr.mxu0 0.0
    %482 = vmatpush1.msra.mxu0 0.0
    %483 = vmatprep.subr.mxu0 0.0
    %484 = vmatpush1.msra.mxu0 0.0
    %485 = vmatprep.subr.mxu0 0.0
    %486 = vmatpush1.msra.mxu0 0.0
    %487 = vmatprep.subr.mxu0 0.0
    %488 = vmatpush1.msra.mxu0 0.0
    %489 = vmatprep.subr.mxu0 0.0
    %490 = vmatpush1.msra.mxu0 0.0
    %491 = vmatprep.subr.mxu0 0.0
    %492 = vmatpush1.msra.mxu0 0.0
    %493 = vmatprep.subr.mxu0 0.0
    %494 = vmatpush1.msra.mxu0 0.0
    %495 = vmatprep.subr.mxu0 0.0
    %496 = vmatpush1.msra.mxu0 0.0
    %497 = vmatprep.subr.mxu0 0.0
    %498 = vmatpush1.msra.mxu0 0.0
    %499 = vmatprep.subr.mxu0 0.0
    %500 = vmatpush1.msra.mxu0 0.0
    %501 = vmatprep.subr.mxu0 0.0
    %502 = vmatpush1.msra.mxu0 0.0
    %503 = vmatprep.subr.mxu0 0.0
    %504 = vmatpush1.msra.mxu0 0.0
    %505 = vmatprep.subr.mxu0 0.0
    %506 = vmatpush1.msra.mxu0 0.0
    %507 = vmatprep.subr.mxu0 0.0
    %508 = vmatpush1.msra.mxu0 0.0
    %509 = vmatprep.subr.mxu0 0.0
    %510 = vmatpush1.msra.mxu0 0.0
    %511 = vmatprep.subr.mxu0 0.0
    %512 = vmatpush1.msra.mxu0 0.0
    %513 = vmatprep.subr.mxu0 0.0
    %514 = vmatpush1.msra.mxu0 0.0
    %515 = vmatprep.subr.mxu0 0.0
    %516 = vmatpush1.msra.mxu0 0.0
    %517 = vmatprep.subr.mxu0 0.0
    %518 = vmatpush1.msra.mxu0 0.0
    %519 = vmatprep.subr.mxu0 0.0
    %520 = vmatpush1.msra.mxu0 0.0
    %521 = vmatprep.subr.mxu0 0.0
    %522 = vmatpush1.msra.mxu0 0.0
    %523 = vmatprep.subr.mxu0 0.0
    %524 = vmatpush1.msra.mxu0 0.0
    %525 = vmatprep.subr.mxu0 0.0
    %526 = vmatpush1.msra.mxu0 0.0
    %527 = vmatprep.subr.mxu0 0.0
    %528 = vmatpush1.msra.mxu0 0.0
    %529 = vmatprep.mubr.f32.mxu0 0.0
    %530 = vmatmul.mubr.f32.gmra.mrb[0].mxu0 %v463
    %v531 = vpop.f32.mrb[0].mxu0
    %v532 = vadd.f32 %v461, %v531
    %v533 = vpop.f32.mrb[0].mxu0
    %534 = vdwg.mxu0
    %v535 = vmax.f32 %v532, 0.0
    %v536 = vld [vmem:[#allocation2 + $0xc0] sm:$0xff]
    %v537 = vld [vmem:[#allocation2 + $0xc8] sm:$0xff]
    %v538 = vld [vmem:[#allocation2 + $0xd0] sm:$0xff]
    %v539 = vld [vmem:[#allocation2 + $0xd8] sm:$0xff]
    %v540 = vlaneseq
    %v541 = vshrl.u32 %v540, 7
    %v542 = vsub.s32 3, %v541
    %v543 = vrot.slane %v286, %v542
    %v545 = vsel %vm135, %v535, 0
    %547 = vmatprep.subr.mxu0 0.0
    %548 = vmatpush1.msra.mxu0 %v536
    %549 = vmatprep.subr.mxu0 0.0
    %550 = vmatpush1.msra.mxu0 %v537
    %551 = vmatprep.subr.mxu0 0.0
    %552 = vmatpush1.msra.mxu0 %v538
    %553 = vmatprep.subr.mxu0 0.0
    %554 = vmatpush1.msra.mxu0 %v539
    %555 = vmatprep.subr.mxu0 0.0
    %556 = vmatpush1.msra.mxu0 0.0
    %557 = vmatprep.subr.mxu0 0.0
    %558 = vmatpush1.msra.mxu0 0.0
    %559 = vmatprep.subr.mxu0 0.0
    %560 = vmatpush1.msra.mxu0 0.0
    %561 = vmatprep.subr.mxu0 0.0
    %562 = vmatpush1.msra.mxu0 0.0
    %563 = vmatprep.subr.mxu0 0.0
    %564 = vmatpush1.msra.mxu0 0.0
    %565 = vmatprep.subr.mxu0 0.0
    %566 = vmatpush1.msra.mxu0 0.0
    %567 = vmatprep.subr.mxu0 0.0
    %568 = vmatpush1.msra.mxu0 0.0
    %569 = vmatprep.subr.mxu0 0.0
    %570 = vmatpush1.msra.mxu0 0.0
    %571 = vmatprep.subr.mxu0 0.0
    %572 = vmatpush1.msra.mxu0 0.0
    %573 = vmatprep.subr.mxu0 0.0
    %574 = vmatpush1.msra.mxu0 0.0
    %575 = vmatprep.subr.mxu0 0.0
    %576 = vmatpush1.msra.mxu0 0.0
    %577 = vmatprep.subr.mxu0 0.0
    %578 = vmatpush1.msra.mxu0 0.0
    %579 = vmatprep.subr.mxu0 0.0
    %580 = vmatpush1.msra.mxu0 0.0
    %581 = vmatprep.subr.mxu0 0.0
    %582 = vmatpush1.msra.mxu0 0.0
    %583 = vmatprep.subr.mxu0 0.0
    %584 = vmatpush1.msra.mxu0 0.0
    %585 = vmatprep.subr.mxu0 0.0
    %586 = vmatpush1.msra.mxu0 0.0
    %587 = vmatprep.subr.mxu0 0.0
    %588 = vmatpush1.msra.mxu0 0.0
    %589 = vmatprep.subr.mxu0 0.0
    %590 = vmatpush1.msra.mxu0 0.0
    %591 = vmatprep.subr.mxu0 0.0
    %592 = vmatpush1.msra.mxu0 0.0
    %593 = vmatprep.subr.mxu0 0.0
    %594 = vmatpush1.msra.mxu0 0.0
    %595 = vmatprep.subr.mxu0 0.0
    %596 = vmatpush1.msra.mxu0 0.0
    %597 = vmatprep.subr.mxu0 0.0
    %598 = vmatpush1.msra.mxu0 0.0
    %599 = vmatprep.subr.mxu0 0.0
    %600 = vmatpush1.msra.mxu0 0.0
    %601 = vmatprep.subr.mxu0 0.0
    %602 = vmatpush1.msra.mxu0 0.0
    %603 = vmatprep.subr.mxu0 0.0
    %604 = vmatpush1.msra.mxu0 0.0
    %605 = vmatprep.subr.mxu0 0.0
    %606 = vmatpush1.msra.mxu0 0.0
    %607 = vmatprep.subr.mxu0 0.0
    %608 = vmatpush1.msra.mxu0 0.0
    %609 = vmatprep.subr.mxu0 0.0
    %610 = vmatpush1.msra.mxu0 0.0
    %611 = vmatprep.mubr.f32.mxu0 0.0
    %612 = vmatmul.mubr.f32.gmra.mrb[0].mxu0 %v545
    %v613 = vpop.f32.mrb[0].mxu0
    %v614 = vadd.f32 %v543, %v613
    %v615 = vpop.f32.mrb[0].mxu0
    %616 = vdwg.mxu0
    %v617 = vmax.f32 %v614, 0.0
    %v618 = vld [vmem:[#allocation2 + $0xe0] sm:$0xff]
    %v619 = vld [vmem:[#allocation2 + $0xe8] sm:$0xff]
    %v620 = vld [vmem:[#allocation2 + $0xf0] sm:$0xff]
    %v621 = vld [vmem:[#allocation2 + $0xf8] sm:$0xff]
    %v622 = vlaneseq
    %v623 = vshrl.u32 %v622, 7
    %v624 = vsub.s32 4, %v623
    %v625 = vrot.slane %v286, %v624
    %v627 = vsel %vm135, %v617, 0
    %629 = vmatprep.subr.mxu0 0.0
    %630 = vmatpush1.msra.mxu0 %v618
    %631 = vmatprep.subr.mxu0 0.0
    %632 = vmatpush1.msra.mxu0 %v619
    %633 = vmatprep.subr.mxu0 0.0
    %634 = vmatpush1.msra.mxu0 %v620
    %635 = vmatprep.subr.mxu0 0.0
    %636 = vmatpush1.msra.mxu0 %v621
    %637 = vmatprep.subr.mxu0 0.0
    %638 = vmatpush1.msra.mxu0 0.0
    %639 = vmatprep.subr.mxu0 0.0
    %640 = vmatpush1.msra.mxu0 0.0
    %641 = vmatprep.subr.mxu0 0.0
    %642 = vmatpush1.msra.mxu0 0.0
    %643 = vmatprep.subr.mxu0 0.0
    %644 = vmatpush1.msra.mxu0 0.0
    %645 = vmatprep.subr.mxu0 0.0
    %646 = vmatpush1.msra.mxu0 0.0
    %647 = vmatprep.subr.mxu0 0.0
    %648 = vmatpush1.msra.mxu0 0.0
    %649 = vmatprep.subr.mxu0 0.0
    %650 = vmatpush1.msra.mxu0 0.0
    %651 = vmatprep.subr.mxu0 0.0
    %652 = vmatpush1.msra.mxu0 0.0
    %653 = vmatprep.subr.mxu0 0.0
    %654 = vmatpush1.msra.mxu0 0.0
    %655 = vmatprep.subr.mxu0 0.0
    %656 = vmatpush1.msra.mxu0 0.0
    %657 = vmatprep.subr.mxu0 0.0
    %658 = vmatpush1.msra.mxu0 0.0
    %659 = vmatprep.subr.mxu0 0.0
    %660 = vmatpush1.msra.mxu0 0.0
    %661 = vmatprep.subr.mxu0 0.0
    %662 = vmatpush1.msra.mxu0 0.0
    %663 = vmatprep.subr.mxu0 0.0
    %664 = vmatpush1.msra.mxu0 0.0
    %665 = vmatprep.subr.mxu0 0.0
    %666 = vmatpush1.msra.mxu0 0.0
    %667 = vmatprep.subr.mxu0 0.0
    %668 = vmatpush1.msra.mxu0 0.0
    %669 = vmatprep.subr.mxu0 0.0
    %670 = vmatpush1.msra.mxu0 0.0
    %671 = vmatprep.subr.mxu0 0.0
    %672 = vmatpush1.msra.mxu0 0.0
    %673 = vmatprep.subr.mxu0 0.0
    %674 = vmatpush1.msra.mxu0 0.0
    %675 = vmatprep.subr.mxu0 0.0
    %676 = vmatpush1.msra.mxu0 0.0
    %677 = vmatprep.subr.mxu0 0.0
    %678 = vmatpush1.msra.mxu0 0.0
    %679 = vmatprep.subr.mxu0 0.0
    %680 = vmatpush1.msra.mxu0 0.0
    %681 = vmatprep.subr.mxu0 0.0
    %682 = vmatpush1.msra.mxu0 0.0
    %683 = vmatprep.subr.mxu0 0.0
    %684 = vmatpush1.msra.mxu0 0.0
    %685 = vmatprep.subr.mxu0 0.0
    %686 = vmatpush1.msra.mxu0 0.0
    %687 = vmatprep.subr.mxu0 0.0
    %688 = vmatpush1.msra.mxu0 0.0
    %689 = vmatprep.subr.mxu0 0.0
    %690 = vmatpush1.msra.mxu0 0.0
    %691 = vmatprep.subr.mxu0 0.0
    %692 = vmatpush1.msra.mxu0 0.0
    %693 = vmatprep.mubr.f32.mxu0 0.0
    %694 = vmatmul.mubr.f32.gmra.mrb[0].mxu0 %v627
    %v695 = vpop.f32.mrb[0].mxu0
    %v696 = vadd.f32 %v625, %v695
    %v697 = vpop.f32.mrb[0].mxu0
    %698 = vdwg.mxu0
    %v699 = vmax.f32 %v696, 0.0
    %vm700 = vcmask 254976
    %701 = vst.msk [vmem:[#allocation5] sm:$0x3] %vm700, %v699
    // Predicated region
    $region14: #{forward.1} parent=1 // pred_check
      _
    $region15: #{forward.1} parent=1 // pred_check_branch
      %703 = sbr.rel (0) target = $region17
    $region16: #{forward.1} parent=1 // pred_region
      %s705 = ssub.s32 32, 32
      %706 = vsyncadd [#allocation4], %s705
      %s708 = sshll.u32 [#allocation5], 4
      %s709 = int_to_ptr.vmem [resolvable:$true] %s708
      %711 = dma.vmem_to_hbm [thread:$0]  %s709, 32, %s2, [#allocation4]
    $region17: #{forward.1} parent=1 // pred_fallthru
      _
    // Predicated region
    $region18: #{forward.1} parent=1 // pred_check
      _
    $region19: #{forward.1} parent=1 // pred_check_branch
      %713 = sbr.rel (0) target = $region21
    $region20: #{forward.1} parent=1 // pred_region
      %714 = dma.done [#allocation4], 32
    $region21: #{forward.1} parent=1 // pred_fallthru
      _
    %715 = vsyncpa [#allocation3], 1
    %716 = vsyncpa [#allocation4], 1

</llo_original>
